<compile_context>
chip_gen: v7x
topology: tpu7x:2x2x1
jax: 0.10.0
libtpu: 0.0.40
codegen_flags: <defaults>
</compile_context>

<pallas_src>
import functools

import jax
import jax.numpy as jnp
from jax.experimental import pallas as pl
from jax.experimental.pallas import tpu as pltpu


def _round_up(n, m):
    return ((n + m - 1) // m) * m


def _policy_kernel(x_ref, slab_ref, out_ref, *,
                   state_dim, hidden, action_dim, r_bias, r_heads, head_pad):
    S, H, A, P = state_dim, hidden, action_dim, head_pad

    x = x_ref[...]                                       # [B, S] f32

    # ---- fc1 + ReLU as a VPU broadcast-MAC --------------------------------
    # K = state_dim (3) is a degenerate MXU shape (full weight push + result
    # drain for ~3k useful flops); a few VALU multiply-adds are effectively
    # free and leave the MXU to the fused-head pass below.
    h = slab_ref[r_bias:r_bias + 1, :H]                  # [1, H] fc1 bias
    for k in range(S):                                   # statically unrolled
        h = h + x[:, k:k + 1] * slab_ref[k:k + 1, :H]    # [B,1]*[1,H] -> [B,H]
    h = jnp.maximum(h, 0.0)                              # [B, H]

    # ---- fused mu|std heads: ONE MXU pass, lane-dense [B, P] result -------
    wh = slab_ref[r_heads:r_heads + H, :P]               # [H, P] (mu | std | pad)
    bh = slab_ref[r_bias + 1:r_bias + 2, :P]             # [1, P] fused head bias
    lin = jnp.dot(h, wh, preferred_element_type=jnp.float32) + bh

    # Columns [0, A): mu head; [A, 2A): std head; rest: padding (never read).
    # Both activations run over the full vreg (cheap EUP work); a per-column
    # iota select picks the right one.  All activation math stays in f32.
    col = jax.lax.broadcasted_iota(jnp.int32, lin.shape, 1)
    mu_all = 2.0 * jnp.tanh(lin)
    std_all = jnp.logaddexp(lin, 0.0)                    # numerically stable softplus
    out_ref[...] = jnp.where(col < A, mu_all, std_all)   # [B, P]


def policy_net_continuous(x, slab, *, action_dim):
    """x: [B, state_dim] f32. slab: packed parameter slab from pack_params().
    Returns (mu, std), each [B, action_dim]."""
    B, S = x.shape
    rows, W = slab.shape

    n_out = 2 * action_dim
    P = max(128, _round_up(n_out, 128))      # lane-dense fused-head width
    r_bias = S                               # slab row of fc1 bias (head bias = +1)
    r_heads = _round_up(S + 2, 8)            # sublane-aligned start of head weights
    H = rows - r_heads                       # hidden width (128)
    assert P <= W

    cost = pl.CostEstimate(
        flops=2 * B * S * H + 2 * B * H * P,
        transcendentals=3 * B * P,           # tanh + exp + log1p over the padded slab
        bytes_accessed=4 * (x.size + slab.size + B * P),
    )

    vmem = pl.BlockSpec(memory_space=pltpu.MemorySpace.VMEM)
    out = pl.pallas_call(
        functools.partial(
            _policy_kernel,
            state_dim=S, hidden=H, action_dim=action_dim,
            r_bias=r_bias, r_heads=r_heads, head_pad=P),
        out_shape=jax.ShapeDtypeStruct((B, P), jnp.float32),
        in_specs=[vmem, vmem],
        out_specs=vmem,
        cost_estimate=cost,
    )(x, slab)

    # One contiguous slice of the lane-dense slab, then a free split.
    heads = out[:, :n_out]
    return heads[:, :action_dim], heads[:, action_dim:]


def pack_params(p):
    """One-time packing of ALL parameters into a single sublane-aligned f32 slab.

    Layout (lane width W = max(hidden, head_pad)):
      rows [0, S)               : fc1 weight  w1  ([S, H] in columns [:H])
      row  S                    : fc1 bias    b1  (columns [:H])
      row  S + 1                : fused head bias (b_mu | b_std, columns [:2A])
      rows [r_heads, r_heads+H) : fused head weights (w_mu | w_std, columns [:2A])
    with r_heads = round_up(S + 2, 8) so the MXU operand starts tile-aligned.
    One slab => one HBM->VMEM DMA per call instead of three.
    """
    S, H = p["w1"].shape
    A = p["w_mu"].shape[1]
    n_out = 2 * A
    P = max(128, _round_up(n_out, 128))
    W = max(H, P)
    r_heads = _round_up(S + 2, 8)
    rows = _round_up(r_heads + H, 8)

    slab = jnp.zeros((rows, W), jnp.float32)
    slab = slab.at[:S, :H].set(p["w1"])
    slab = slab.at[S, :H].set(p["b1"][0])
    slab = slab.at[S + 1, :A].set(p["b_mu"][0])
    slab = slab.at[S + 1, A:n_out].set(p["b_std"][0])
    slab = slab.at[r_heads:r_heads + H, :A].set(p["w_mu"])
    slab = slab.at[r_heads:r_heads + H, A:n_out].set(p["w_std"])
    return slab


def init_params(key, state_dim, action_dim, hidden=128):
    """Deterministic init mimicking torch.nn.Linear's U(-1/sqrt(in), 1/sqrt(in)).
    Weights stored as [in, out] (already transposed relative to PyTorch)."""
    ks = jax.random.split(key, 6)

    def uniform(k, shape, fan_in):
        bound = 1.0 / jnp.sqrt(float(fan_in))
        return jax.random.uniform(k, shape, jnp.float32, -bound, bound)

    return {
        "w1":    uniform(ks[0], (state_dim, hidden), state_dim),
        "b1":    uniform(ks[1], (1, hidden), state_dim),
        "w_mu":  uniform(ks[2], (hidden, action_dim), hidden),
        "b_mu":  uniform(ks[3], (1, action_dim), hidden),
        "w_std": uniform(ks[4], (hidden, action_dim), hidden),
        "b_std": uniform(ks[5], (1, action_dim), hidden),
    }


if __name__ == "__main__":
    # Pendulum-v1: state_dim=3, action_dim=1. Small batch of 8 states.
    B, STATE_DIM, ACTION_DIM = 8, 3, 1

    key = jax.random.PRNGKey(0)
    k_params, k_x = jax.random.split(key)
    raw = init_params(k_params, STATE_DIM, ACTION_DIM)
    slab = pack_params(raw)                      # packed ONCE, outside jit
    x = jax.random.normal(k_x, (B, STATE_DIM), dtype=jnp.float32)

    fwd = jax.jit(policy_net_continuous, static_argnames="action_dim")
    mu, std = fwd(x, slab, action_dim=ACTION_DIM)
    jax.block_until_ready((mu, std))

    # Pure-JAX reference check (same math, no Pallas).
    h_ref = jnp.maximum(x @ raw["w1"] + raw["b1"], 0.0)
    mu_ref = 2.0 * jnp.tanh(h_ref @ raw["w_mu"] + raw["b_mu"])
    std_ref = jax.nn.softplus(h_ref @ raw["w_std"] + raw["b_std"])
    assert mu.shape == (B, ACTION_DIM) and std.shape == (B, ACTION_DIM)
    assert jnp.allclose(mu, mu_ref, atol=1e-5), "mu mismatch"
    assert jnp.allclose(std, std_ref, atol=1e-5), "std mismatch"

    print("KERNEL_OK")
</pallas_src>

<mosaic_0001>
module attributes {stable_mosaic.version = 11 : i64} {
  func.func @_policy_kernel(%arg0: memref<8x3xf32, #tpu.memory_space<vmem>>, %arg1: memref<136x128xf32, #tpu.memory_space<vmem>>, %arg2: memref<8x128xf32, #tpu.memory_space<vmem>>) attributes {dimension_semantics = [], scalar_prefetch = 0 : i64, scratch_operands = 0 : i64, tpu.core_type = #tpu.core_type<tc>} {
    %c0 = arith.constant 0 : index
    %c0_0 = arith.constant 0 : index
    %0 = vector.load %arg0[%c0, %c0_0] : memref<8x3xf32, #tpu.memory_space<vmem>>, vector<8x3xf32>
    %c3 = arith.constant 3 : index
    %c0_1 = arith.constant 0 : index
    %1 = vector.load %arg1[%c3, %c0_1] : memref<136x128xf32, #tpu.memory_space<vmem>>, vector<1x128xf32>
    %2 = vector.extract_strided_slice %0 {offsets = [0, 0], sizes = [8, 1], strides = [1, 1]} : vector<8x3xf32> to vector<8x1xf32>
    %c0_2 = arith.constant 0 : index
    %c0_3 = arith.constant 0 : index
    %3 = vector.load %arg1[%c0_2, %c0_3] : memref<136x128xf32, #tpu.memory_space<vmem>>, vector<1x128xf32>
    %4 = vector.broadcast %2 : vector<8x1xf32> to vector<8x128xf32>
    %5 = vector.broadcast %3 : vector<1x128xf32> to vector<8x128xf32>
    %6 = arith.mulf %4, %5 : vector<8x128xf32>
    %7 = vector.broadcast %1 : vector<1x128xf32> to vector<8x128xf32>
    %8 = arith.addf %7, %6 : vector<8x128xf32>
    %9 = vector.extract_strided_slice %0 {offsets = [0, 1], sizes = [8, 1], strides = [1, 1]} : vector<8x3xf32> to vector<8x1xf32>
    %c1 = arith.constant 1 : index
    %c0_4 = arith.constant 0 : index
    %10 = vector.load %arg1[%c1, %c0_4] : memref<136x128xf32, #tpu.memory_space<vmem>>, vector<1x128xf32>
    %11 = vector.broadcast %9 : vector<8x1xf32> to vector<8x128xf32>
    %12 = vector.broadcast %10 : vector<1x128xf32> to vector<8x128xf32>
    %13 = arith.mulf %11, %12 : vector<8x128xf32>
    %14 = arith.addf %8, %13 : vector<8x128xf32>
    %15 = vector.extract_strided_slice %0 {offsets = [0, 2], sizes = [8, 1], strides = [1, 1]} : vector<8x3xf32> to vector<8x1xf32>
    %c2 = arith.constant 2 : index
    %c0_5 = arith.constant 0 : index
    %16 = vector.load %arg1[%c2, %c0_5] : memref<136x128xf32, #tpu.memory_space<vmem>>, vector<1x128xf32>
    %17 = vector.broadcast %15 : vector<8x1xf32> to vector<8x128xf32>
    %18 = vector.broadcast %16 : vector<1x128xf32> to vector<8x128xf32>
    %19 = arith.mulf %17, %18 : vector<8x128xf32>
    %20 = arith.addf %14, %19 : vector<8x128xf32>
    %cst = arith.constant 0.000000e+00 : f32
    %21 = vector.broadcast %cst : f32 to vector<8x128xf32>
    %22 = arith.maximumf %20, %21 : vector<8x128xf32>
    %c8 = arith.constant 8 : index
    %c0_6 = arith.constant 0 : index
    %23 = vector.load %arg1[%c8, %c0_6] : memref<136x128xf32, #tpu.memory_space<vmem>>, vector<128x128xf32>
    %c4 = arith.constant 4 : index
    %c0_7 = arith.constant 0 : index
    %24 = vector.load %arg1[%c4, %c0_7] : memref<136x128xf32, #tpu.memory_space<vmem>>, vector<1x128xf32>
    %cst_8 = arith.constant dense<0.000000e+00> : vector<8x128xf32>
    %25 = tpu.matmul %22, %23, %cst_8 {dimension_numbers = #tpu.dot_dimension_numbers<[1], [0], [0], [1], [0, 0, 1, 1], [], []>} : vector<8x128xf32>, vector<128x128xf32>, vector<8x128xf32> -> vector<8x128xf32>
    %26 = vector.broadcast %24 : vector<1x128xf32> to vector<8x128xf32>
    %27 = arith.addf %25, %26 : vector<8x128xf32>
    %28 = tpu.iota {dimensions = array<i32: 1>} : vector<8x128xi32>
    %29 = math.tanh %27 : vector<8x128xf32>
    %cst_9 = arith.constant 2.000000e+00 : f32
    %30 = vector.broadcast %cst_9 : f32 to vector<8x128xf32>
    %31 = arith.mulf %30, %29 : vector<8x128xf32>
    %cst_10 = arith.constant 0.000000e+00 : f32
    %32 = vector.broadcast %cst_10 : f32 to vector<8x128xf32>
    %33 = arith.maximumf %27, %32 : vector<8x128xf32>
    %34 = vector.broadcast %cst_10 : f32 to vector<8x128xf32>
    %35 = arith.subf %27, %34 : vector<8x128xf32>
    %36 = arith.cmpf one, %35, %35 : vector<8x128xf32>
    %37 = vector.broadcast %cst_10 : f32 to vector<8x128xf32>
    %38 = arith.addf %27, %37 : vector<8x128xf32>
    %39 = math.absf %35 : vector<8x128xf32>
    %cst_11 = arith.constant 0.000000e+00 : f32
    %40 = vector.broadcast %cst_11 : f32 to vector<8x128xf32>
    %41 = arith.subf %40, %39 : vector<8x128xf32>
    %42 = math.exp %41 : vector<8x128xf32>
    %43 = math.log1p %42 : vector<8x128xf32>
    %44 = arith.addf %33, %43 : vector<8x128xf32>
    %45 = arith.select %36, %38, %44 : vector<8x128xi1>, vector<8x128xf32>
    %c1_i32 = arith.constant 1 : i32
    %46 = vector.broadcast %c1_i32 : i32 to vector<8x128xi32>
    %47 = arith.cmpi slt, %28, %46 : vector<8x128xi32>
    %48 = arith.select %47, %31, %45 : vector<8x128xi1>, vector<8x128xf32>
    %c0_12 = arith.constant 0 : index
    %c0_13 = arith.constant 0 : index
    %49 = vector.load %arg2[%c0_12, %c0_13] : memref<8x128xf32, #tpu.memory_space<vmem>>, vector<8x128xf32>
    tpu.vector_store %arg2[%c0_12, %c0_13], %48 {strides = array<i32>} : memref<8x128xf32, #tpu.memory_space<vmem>>, vector<8x128xf32>,
    return
  }
}

</mosaic_0001>

<llo_original>
// kernel: policy_net_continuous.1
$region0: #{policy_net_continuous.1}
  #allocation0 [shape = 'u32[]', space=smem, size = 0x4, offset = 0x4, fixed_abs, tag = 'smem constant byte address 0x4 - core index']
  #allocation1 [shape = 'u32[144,128]{1,0:T(1,128)}', space=vmem, size = 0x12000, scoped, tag = 'internal scratch']
  %s0 = inlined_call_operand.vmem [shape: f32[8,3], index: 0, kind: input, shape index: {}]
  %s1 = inlined_call_operand.hbm [shape: f32[136,128], index: 1, kind: input, shape index: {}]
  %s2 = inlined_call_operand.vmem [shape: f32[8,128], index: 2, kind: output, shape index: {}]
  %s3 = sld [smem:[#allocation0]]
  $region22: #{policy_net_continuous.1} parent=0
    _
  %s5 = ssub.s32 1, %s3
  %s6 = scalar_select 0, %s5, %s3
  $region1: #{policy_net_continuous.1} parent=0
    #allocation2 [shape = 'u8[69632]{0}', space=vmem, size = 0x11000, scoped, tag = 'input window, operand 1, single buffered']
    #allocation3 [shape = 's32[1]{0}', space=sflag, size = 0x4, scoped, tag = 'scoped memory for policy_net_continuous.1']
    %7 = vsyncpa [#allocation3], 0
    // Predicated region
    $region2: #{policy_net_continuous.1} parent=1 // pred_check
      _
    $region3: #{policy_net_continuous.1} parent=1 // pred_check_branch
      %9 = sbr.rel (0) target = $region5
    $region4: #{policy_net_continuous.1} parent=1 // pred_region
      _
    $region5: #{policy_net_continuous.1} parent=1 // pred_fallthru
      _
    // Predicated region
    $region6: #{policy_net_continuous.1} parent=1 // pred_check
      _
    $region7: #{policy_net_continuous.1} parent=1 // pred_check_branch
      %11 = sbr.rel (0) target = $region9
    $region8: #{policy_net_continuous.1} parent=1 // pred_region
      %s13 = ssub.s32 2176, 2176
      %14 = vsyncadd [#allocation3], %s13
      %s15 = sshll.u32 [#allocation2], 4
      %s16 = int_to_ptr.vmem [resolvable:$true] %s15
      %21 = dma.hbm_to_vmem [thread:$0]  %s1, 2176, %s16, [#allocation3], 128, 128, 8
    $region9: #{policy_net_continuous.1} parent=1 // pred_fallthru
      _
    // Predicated region
    $region10: #{policy_net_continuous.1} parent=1 // pred_check
      _
    $region11: #{policy_net_continuous.1} parent=1 // pred_check_branch
      %23 = sbr.rel (0) target = $region13
    $region12: #{policy_net_continuous.1} parent=1 // pred_region
      %24 = dma.done [#allocation3], 2176
    $region13: #{policy_net_continuous.1} parent=1 // pred_fallthru
      _
    %v25 = vld [vmem:[%s0] sm:$0xff]
    %v26 = vld [vmem:[#allocation2 + $0x3] sm:$0x1]
    %v27 = vld [vmem:[#allocation2] sm:$0x1]
    %29 = vset.pattern.permute.xlu0 0
    %30 = vperm.xlu0 %29, %v25
    %v31 = vpop.permute.xlu0 %30
    %v33 = vlaneseq
    %v34 = vshrl.u32 %v33, 7
    %v35 = vsub.s32 0, %v34
    %v36 = vrot.slane %v27, %v35
    %v37 = vmul.f32 %v31, %v36
    %v38 = vlaneseq
    %v39 = vshrl.u32 %v38, 7
    %v40 = vsub.s32 0, %v39
    %v41 = vrot.slane %v26, %v40
    %v42 = vadd.f32 %v41, %v37
    %v43 = vld [vmem:[#allocation2 + $0x1] sm:$0x1]
    %44 = vset.pattern.permute.xlu0 1
    %45 = vperm.xlu0 %44, %v25
    %v46 = vpop.permute.xlu0 %45
    %v48 = vlaneseq
    %v49 = vshrl.u32 %v48, 7
    %v50 = vsub.s32 0, %v49
    %v51 = vrot.slane %v43, %v50
    %v52 = vmul.f32 %v46, %v51
    %v53 = vadd.f32 %v42, %v52
    %v54 = vld [vmem:[#allocation2 + $0x2] sm:$0x1]
    %55 = vset.pattern.permute.xlu0 2
    %56 = vperm.xlu0 %55, %v25
    %v57 = vpop.permute.xlu0 %56
    %v59 = vlaneseq
    %v60 = vshrl.u32 %v59, 7
    %v61 = vsub.s32 0, %v60
    %v62 = vrot.slane %v54, %v61
    %v63 = vmul.f32 %v57, %v62
    %v64 = vadd.f32 %v53, %v63
    %v65 = vmax.f32 %v64, 0.0
    %v66 = vld [vmem:[#allocation2 + $0x8] sm:$0xff]
    %v67 = vld [vmem:[#allocation2 + $0x10] sm:$0xff]
    %v68 = vld [vmem:[#allocation2 + $0x18] sm:$0xff]
    %v69 = vld [vmem:[#allocation2 + $0x20] sm:$0xff]
    %v70 = vld [vmem:[#allocation2 + $0x28] sm:$0xff]
    %v71 = vld [vmem:[#allocation2 + $0x30] sm:$0xff]
    %v72 = vld [vmem:[#allocation2 + $0x38] sm:$0xff]
    %v73 = vld [vmem:[#allocation2 + $0x40] sm:$0xff]
    %v74 = vld [vmem:[#allocation2 + $0x48] sm:$0xff]
    %v75 = vld [vmem:[#allocation2 + $0x50] sm:$0xff]
    %v76 = vld [vmem:[#allocation2 + $0x58] sm:$0xff]
    %v77 = vld [vmem:[#allocation2 + $0x60] sm:$0xff]
    %v78 = vld [vmem:[#allocation2 + $0x68] sm:$0xff]
    %v79 = vld [vmem:[#allocation2 + $0x70] sm:$0xff]
    %v80 = vld [vmem:[#allocation2 + $0x78] sm:$0xff]
    %v81 = vld [vmem:[#allocation2 + $0x80] sm:$0xff]
    %v82 = vld [vmem:[#allocation2 + $0x4] sm:$0x1]
    %v83 = vlaneseq
    %v84 = vshrl.u32 %v83, 7
    %v85 = vsub.s32 0, %v84
    %v86 = vrot.slane %v82, %v85
    %87 = vmatprep.subr.mxu0 0.0
    %88 = vmatpush1.msra.mxu0 %v66
    %89 = vmatprep.subr.mxu0 0.0
    %90 = vmatpush1.msra.mxu0 %v67
    %91 = vmatprep.subr.mxu0 0.0
    %92 = vmatpush1.msra.mxu0 %v68
    %93 = vmatprep.subr.mxu0 0.0
    %94 = vmatpush1.msra.mxu0 %v69
    %95 = vmatprep.subr.mxu0 0.0
    %96 = vmatpush1.msra.mxu0 %v70
    %97 = vmatprep.subr.mxu0 0.0
    %98 = vmatpush1.msra.mxu0 %v71
    %99 = vmatprep.subr.mxu0 0.0
    %100 = vmatpush1.msra.mxu0 %v72
    %101 = vmatprep.subr.mxu0 0.0
    %102 = vmatpush1.msra.mxu0 %v73
    %103 = vmatprep.subr.mxu0 0.0
    %104 = vmatpush1.msra.mxu0 %v74
    %105 = vmatprep.subr.mxu0 0.0
    %106 = vmatpush1.msra.mxu0 %v75
    %107 = vmatprep.subr.mxu0 0.0
    %108 = vmatpush1.msra.mxu0 %v76
    %109 = vmatprep.subr.mxu0 0.0
    %110 = vmatpush1.msra.mxu0 %v77
    %111 = vmatprep.subr.mxu0 0.0
    %112 = vmatpush1.msra.mxu0 %v78
    %113 = vmatprep.subr.mxu0 0.0
    %114 = vmatpush1.msra.mxu0 %v79
    %115 = vmatprep.subr.mxu0 0.0
    %116 = vmatpush1.msra.mxu0 %v80
    %117 = vmatprep.subr.mxu0 0.0
    %118 = vmatpush1.msra.mxu0 %v81
    %119 = vmatprep.subr.mxu0 0.0
    %120 = vmatpush1.msra.mxu0 0.0
    %121 = vmatprep.subr.mxu0 0.0
    %122 = vmatpush1.msra.mxu0 0.0
    %123 = vmatprep.subr.mxu0 0.0
    %124 = vmatpush1.msra.mxu0 0.0
    %125 = vmatprep.subr.mxu0 0.0
    %126 = vmatpush1.msra.mxu0 0.0
    %127 = vmatprep.subr.mxu0 0.0
    %128 = vmatpush1.msra.mxu0 0.0
    %129 = vmatprep.subr.mxu0 0.0
    %130 = vmatpush1.msra.mxu0 0.0
    %131 = vmatprep.subr.mxu0 0.0
    %132 = vmatpush1.msra.mxu0 0.0
    %133 = vmatprep.subr.mxu0 0.0
    %134 = vmatpush1.msra.mxu0 0.0
    %135 = vmatprep.subr.mxu0 0.0
    %136 = vmatpush1.msra.mxu0 0.0
    %137 = vmatprep.subr.mxu0 0.0
    %138 = vmatpush1.msra.mxu0 0.0
    %139 = vmatprep.subr.mxu0 0.0
    %140 = vmatpush1.msra.mxu0 0.0
    %141 = vmatprep.subr.mxu0 0.0
    %142 = vmatpush1.msra.mxu0 0.0
    %143 = vmatprep.subr.mxu0 0.0
    %144 = vmatpush1.msra.mxu0 0.0
    %145 = vmatprep.subr.mxu0 0.0
    %146 = vmatpush1.msra.mxu0 0.0
    %147 = vmatprep.subr.mxu0 0.0
    %148 = vmatpush1.msra.mxu0 0.0
    %149 = vmatprep.subr.mxu0 0.0
    %150 = vmatpush1.msra.mxu0 0.0
    %151 = vmatprep.mubr.f32.mxu0 0.0
    %152 = vmatmul.mubr.f32.gmra.mrb[0].mxu0 %v65
    %v153 = vpop.f32.mrb[0].mxu0
    %v154 = vadd.f32 %v86, %v153
    %v155 = vpop.f32.mrb[0].mxu0
    %156 = vdwg.mxu0
    %v157 = vlaneseq
    %v158 = vand.u32 %v157, 127
    %v159 = vtanh.pop %v154
    %v160 = vmul.f32 %v159, 2.0
    %v161 = vmax.f32 %v154, 0.0
    %vm162 = vcmp.ne.f32.partialorder %v154, %v154
    %v163 = vadd.f32 %v154, 0.0
    %v164 = vand.u32 2147483647, %v154
    %v165 = vsub.f32 0.0, %v164
    %v166 = vmul.f32 %v165, 1.442695
    %v167 = vpow.pop %v166
    %v168 = vadd.f32 %v167, 1.0
    %v169 = vlog2.pop %v168
    %v170 = vmul.f32 %v169, 0.6931472
    %v171 = vmul.f32 -0.5, %v167
    %v172 = vadd.f32 %v171, 1.0
    %v173 = vmul.f32 %v172, %v167
    %v174 = vand.u32 2147483647, %v167
    %vm175 = vcmp.lt.f32.partialorder %v174, 0.0004427343
    %v176 = vsel %vm175, %v173, %v170
    %v177 = vadd.f32 %v161, %v176
    %v178 = vsel %vm162, %v163, %v177
    %vm179 = vcmp.lt.s32.totalorder %v158, 1
    %v180 = vsel %vm179, %v160, %v178
    %181 = vst [vmem:[%s2] sm:$0xff] %v180
    // Predicated region
    $region14: #{policy_net_continuous.1} parent=1 // pred_check
      _
    $region15: #{policy_net_continuous.1} parent=1 // pred_check_branch
      %183 = sbr.rel (0) target = $region17
    $region16: #{policy_net_continuous.1} parent=1 // pred_region
      _
    $region17: #{policy_net_continuous.1} parent=1 // pred_fallthru
      _
    // Predicated region
    $region18: #{policy_net_continuous.1} parent=1 // pred_check
      _
    $region19: #{policy_net_continuous.1} parent=1 // pred_check_branch
      %185 = sbr.rel (0) target = $region21
    $region20: #{policy_net_continuous.1} parent=1 // pred_region
      _
    $region21: #{policy_net_continuous.1} parent=1 // pred_fallthru
      _
    %186 = vsyncpa [#allocation3], 1

</llo_original>
